<compile_context>
chip_gen: v5e
topology: v5e:2x2
jax: 0.10.0
libtpu: 0.0.40
codegen_flags: <defaults>
</compile_context>

<pallas_src>
import jax
import jax.numpy as jnp
from jax import lax
from jax.experimental import pallas as pl
from jax.experimental.pallas import tpu as pltpu


def _gather_rows_kernel(idx_ref, x_ref, o_ref):
    """o[b, k, :] = x[b, idx[b, k, 0], :] via a one-hot MXU gather.

    Block shapes:
      idx_ref: (TB, L_out, 1) int32  (VMEM)
      x_ref:   (TB, L,     TD)
      o_ref:   (TB, L_out, TD)
    """
    x = x_ref[...]                                  # (TB, L, TD)
    idx = idx_ref[...]                              # (TB, L_out, 1)
    tb, l_out = idx.shape[0], idx.shape[1]
    l_in = x.shape[1]

    # one-hot selection matrix built on the VPU (lane-broadcast compare).
    pos = lax.broadcasted_iota(jnp.int32, (tb, l_out, l_in), 2)
    onehot = (pos == idx).astype(x.dtype)           # (TB, L_out, L)

    # Row gather as a batched matmul on the MXU (exact: each row sums one
    # 1.0 * x term), accumulated in f32.
    gathered = jnp.einsum(
        "bkl,bld->bkd", onehot, x, preferred_element_type=jnp.float32
    )
    o_ref[...] = gathered.astype(o_ref.dtype)


def _pick_d_tile(d: int) -> int:
    """Largest 128-multiple tile <= 512 that divides D (lane-dense stores)."""
    if d % 128 != 0:
        return d  # odd D: keep full width (masked stores; pad D in production)
    for cand in range(min(d, 512), 0, -128):
        if d % cand == 0:
            return cand
    return d


def _pick_batch_tile(b, l_in, l_out, td, itemsize,
                     budget_bytes=12 * 1024 * 1024):
    """Batches per grid step so double-buffered blocks stay within budget."""
    per_batch = 2 * itemsize * (l_in + l_out) * td + 8 * l_out * l_in
    cap = max(1, budget_bytes // max(per_batch, 1))
    for t in range(min(b, cap), 0, -1):
        if b % t == 0:
            return t
    return 1


def _gather_rows(x: jax.Array, idx: jax.Array) -> jax.Array:
    """Pallas-backed row gather: out[b, j, :] = x[b, idx[b, j], :].

    x:   (B, L, D)
    idx: (B, L_out) int32
    out: (B, L_out, D)
    """
    B, L, D = x.shape
    L_out = idx.shape[1]
    idx3 = idx.astype(jnp.int32)[..., None]         # (B, L_out, 1) -> VMEM block

    td = _pick_d_tile(D)
    tb = _pick_batch_tile(B, L, L_out, td, jnp.dtype(x.dtype).itemsize)
    grid = (B // tb, D // td)

    return pl.pallas_call(
        _gather_rows_kernel,
        out_shape=jax.ShapeDtypeStruct((B, L_out, D), x.dtype),
        grid=grid,
        in_specs=[
            pl.BlockSpec((tb, L_out, 1), lambda b, d: (b, 0, 0)),
            pl.BlockSpec((tb, L, td), lambda b, d: (b, 0, d)),
        ],
        out_specs=pl.BlockSpec((tb, L_out, td), lambda b, d: (b, 0, d)),
        compiler_params=pltpu.CompilerParams(
            # batch tiles and D tiles are fully independent -> shard across
            # v7x's two TensorCores; harmless on v5e/v6e.
            dimension_semantics=("parallel", "parallel"),
            # above v5e's 16 MiB scoped default, below v7x's 64 MiB physical.
            vmem_limit_bytes=48 * 1024 * 1024,
        ),
    )(idx3, x)


def patch_dropout_forward(
    x: jax.Array,
    key: jax.Array,
    *,
    prob: float = 0.5,
    num_prefix_tokens: int = 1,
    ordered: bool = False,
    training: bool = True,
):
    """JAX/Pallas equivalent of timm's patch_dropout_forward.

    Returns (output, keep_indices or None). keep_indices index into the patch
    (non-prefix) part of the sequence, matching the PyTorch semantics.
    """
    if not training or prob == 0.0:
        return x, None

    B, L_total, D = x.shape
    L = L_total - num_prefix_tokens
    num_keep = max(1, int(L * (1.0 - prob)))

    # Random subset selection (plain-JAX glue). top_k(-noise) == indices of the
    # num_keep smallest noise values == argsort(noise)[:, :num_keep].
    noise = jax.random.normal(key, (B, L))
    _, keep_indices = jax.lax.top_k(-noise, num_keep)
    if ordered:
        keep_indices = jnp.sort(keep_indices, axis=-1)
    keep_indices = keep_indices.astype(jnp.int32)

    # Combined gather indices: prefix rows first, then selected patch rows.
    # The prefix rows ride through the same vectorized gather, so the kernel
    # does a single unmasked full-block store (no offset partial stores).
    if num_prefix_tokens:
        prefix_idx = jnp.broadcast_to(
            jnp.arange(num_prefix_tokens, dtype=jnp.int32)[None, :],
            (B, num_prefix_tokens),
        )
        full_idx = jnp.concatenate(
            [prefix_idx, keep_indices + num_prefix_tokens], axis=1
        )
    else:
        full_idx = keep_indices

    out = _gather_rows(x, full_idx)
    return out, keep_indices


class PatchDropout:
    """Patch Dropout (drops random patches, keeps prefix tokens)."""

    def __init__(self, prob: float = 0.5, num_prefix_tokens: int = 1,
                 ordered: bool = False):
        assert 0 <= prob < 1.0
        self.prob = prob
        self.num_prefix_tokens = num_prefix_tokens
        self.ordered = ordered
        self.training = True

    def __call__(self, x: jax.Array, key: jax.Array) -> jax.Array:
        out, _ = patch_dropout_forward(
            x, key,
            prob=self.prob,
            num_prefix_tokens=self.num_prefix_tokens,
            ordered=self.ordered,
            training=self.training,
        )
        return out


if __name__ == "__main__":
    root = jax.random.PRNGKey(0)
    k_x, k_drop, k_x2, k_drop2 = jax.random.split(root, 4)

    # --- Test 1: small shape, 1 cls token, D < 128 (masked-store path). ---
    B, num_prefix, L_patches, D = 2, 1, 8, 32
    x = jax.random.normal(k_x, (B, num_prefix + L_patches, D), dtype=jnp.float32)

    out, keep_indices = patch_dropout_forward(
        x, k_drop, prob=0.5, num_prefix_tokens=num_prefix, ordered=False,
        training=True,
    )
    out = jax.block_until_ready(out)

    prefix = x[:, :num_prefix]
    patches = x[:, num_prefix:]
    ref_patches = jnp.take_along_axis(
        patches, keep_indices[..., None].astype(jnp.int32), axis=1
    )
    ref = jnp.concatenate([prefix, ref_patches], axis=1)
    assert out.shape == ref.shape
    assert bool(jnp.allclose(out, ref, atol=1e-6)), "Pallas gather mismatch (test 1)"

    # Module wrapper path (same key -> same result).
    mod = PatchDropout(prob=0.5, num_prefix_tokens=num_prefix, ordered=False)
    out_mod = jax.block_until_ready(mod(x, k_drop))
    assert bool(jnp.allclose(out_mod, out, atol=1e-6))

    # --- Test 2: larger D (exercises the D-tiling grid axis), ordered, 2 prefix. ---
    B2, P2, L2, D2 = 4, 2, 16, 1024
    x2 = jax.random.normal(k_x2, (B2, P2 + L2, D2), dtype=jnp.float32)
    out2, keep2 = patch_dropout_forward(
        x2, k_drop2, prob=0.25, num_prefix_tokens=P2, ordered=True, training=True,
    )
    out2 = jax.block_until_ready(out2)
    ref2 = jnp.concatenate(
        [x2[:, :P2],
         jnp.take_along_axis(x2[:, P2:], keep2[..., None].astype(jnp.int32), axis=1)],
        axis=1,
    )
    assert out2.shape == ref2.shape
    assert bool(jnp.allclose(out2, ref2, atol=1e-6)), "Pallas gather mismatch (test 2)"
    assert bool(jnp.all(keep2[:, 1:] > keep2[:, :-1])), "ordered indices not sorted"

    # --- Test 3: no prefix tokens. ---
    out3, keep3 = patch_dropout_forward(
        x[:, 1:], k_drop, prob=0.5, num_prefix_tokens=0, ordered=False,
        training=True,
    )
    out3 = jax.block_until_ready(out3)
    ref3 = jnp.take_along_axis(
        x[:, 1:], keep3[..., None].astype(jnp.int32), axis=1
    )
    assert bool(jnp.allclose(out3, ref3, atol=1e-6)), "Pallas gather mismatch (test 3)"

    # --- Eval / prob=0 path returns input unchanged. ---
    out_eval, idx_eval = patch_dropout_forward(
        x, k_drop, prob=0.5, num_prefix_tokens=num_prefix, ordered=False,
        training=False,
    )
    assert idx_eval is None and out_eval.shape == x.shape

    print("KERNEL_OK")
</pallas_src>

<mosaic_0001>
module attributes {stable_mosaic.version = 11 : i64} {
  func.func @_gather_rows_kernel(%arg0: i32, %arg1: i32, %arg2: memref<2x5x1xi32, #tpu.memory_space<vmem>>, %arg3: memref<2x9x32xf32, #tpu.memory_space<vmem>>, %arg4: memref<2x5x32xf32, #tpu.memory_space<vmem>>) attributes {dimension_semantics = [#tpu.dimension_semantics<parallel>, #tpu.dimension_semantics<parallel>], iteration_bounds = array<i64: 1, 1>, scalar_prefetch = 0 : i64, scratch_operands = 0 : i64, tpu.core_type = #tpu.core_type<tc>, window_params = [{transform_indices = @transform_0, window_bounds = array<i64: 2, 5, 1>}, {transform_indices = @transform_1, window_bounds = array<i64: 2, 9, 32>}, {transform_indices = @transform_2, window_bounds = array<i64: 2, 5, 32>}]} {
    %c0 = arith.constant 0 : index
    %c0_0 = arith.constant 0 : index
    %c0_1 = arith.constant 0 : index
    %0 = vector.load %arg3[%c0, %c0_0, %c0_1] : memref<2x9x32xf32, #tpu.memory_space<vmem>>, vector<2x9x32xf32>
    %c0_2 = arith.constant 0 : index
    %c0_3 = arith.constant 0 : index
    %c0_4 = arith.constant 0 : index
    %1 = vector.load %arg2[%c0_2, %c0_3, %c0_4] : memref<2x5x1xi32, #tpu.memory_space<vmem>>, vector<2x5x1xi32>
    %2 = tpu.iota {dimensions = array<i32: 2>} : vector<2x5x9xi32>
    %3 = vector.broadcast %1 : vector<2x5x1xi32> to vector<2x5x9xi32>
    %4 = arith.cmpi eq, %2, %3 : vector<2x5x9xi32>
    %5 = arith.extui %4 : vector<2x5x9xi1> to vector<2x5x9xi32>
    %6 = arith.sitofp %5 : vector<2x5x9xi32> to vector<2x5x9xf32>
    "tpu.trace_start"() <{level = 10 : i32, message = "bkl,bld->bkd"}> : () -> ()
    %cst = arith.constant dense<0.000000e+00> : vector<2x5x32xf32>
    %7 = tpu.matmul %6, %0, %cst {dimension_numbers = #tpu.dot_dimension_numbers<[2], [1], [1], [2], [0, 0, 0, 1, 1, 2], [0], [0]>} : vector<2x5x9xf32>, vector<2x9x32xf32>, vector<2x5x32xf32> -> vector<2x5x32xf32>
    "tpu.trace_stop"() : () -> ()
    %c0_5 = arith.constant 0 : index
    %c0_6 = arith.constant 0 : index
    %c0_7 = arith.constant 0 : index
    %8 = vector.load %arg4[%c0_5, %c0_6, %c0_7] : memref<2x5x32xf32, #tpu.memory_space<vmem>>, vector<2x5x32xf32>
    tpu.vector_store %arg4[%c0_5, %c0_6, %c0_7], %7 {strides = array<i32>} : memref<2x5x32xf32, #tpu.memory_space<vmem>>, vector<2x5x32xf32>,
    return
  }
  func.func @transform_0(%arg0: i32, %arg1: i32) -> (i32, i32, i32) {
    %c0_i32 = arith.constant 0 : i32
    %c0_i32_0 = arith.constant 0 : i32
    %c0_i32_1 = arith.constant 0 : i32
    return %arg0, %c0_i32, %c0_i32_0 : i32, i32, i32
  }
  func.func @transform_1(%arg0: i32, %arg1: i32) -> (i32, i32, i32) {
    %c0_i32 = arith.constant 0 : i32
    %c0_i32_0 = arith.constant 0 : i32
    return %arg0, %c0_i32, %arg1 : i32, i32, i32
  }
  func.func @transform_2(%arg0: i32, %arg1: i32) -> (i32, i32, i32) {
    %c0_i32 = arith.constant 0 : i32
    %c0_i32_0 = arith.constant 0 : i32
    return %arg0, %c0_i32, %arg1 : i32, i32, i32
  }
}

</mosaic_0001>

<llo_original>
// kernel: tpu_custom_call.1
$region0: #{tpu_custom_call.1}
  #allocation0 [shape = 'u32[]', space=smem, size = 0x4, offset = 0x4, fixed_abs, tag = 'smem constant byte address 0x4 - core index']
  #allocation1 [shape = 'u32[72,128]{1,0:T(1,128)}', space=vmem, size = 0x9000, scoped, tag = 'internal scratch']
  %s0 = inlined_call_operand.vmem [shape: s32[2,5,1], index: 0, kind: input, shape index: {}]
  %s1 = inlined_call_operand.vmem [shape: f32[2,9,32], index: 1, kind: input, shape index: {}]
  %s2 = inlined_call_operand.vmem [shape: f32[2,5,32], index: 2, kind: output, shape index: {}]
  %s3 = sld [smem:[#allocation0]]
  $region18: #{tpu_custom_call.1} parent=0
    _
  %s5 = ssub.s32 1, %s3
  %s6 = scalar_select 0, %s5, %s3
  // Predicated region
  $region2: #{tpu_custom_call.1} parent=0 // pred_check
    _
  $region3: #{tpu_custom_call.1} parent=0 // pred_check_branch
    %8 = sbr.rel (0) target = $region5
  $region4: #{tpu_custom_call.1} parent=0 // pred_region
    _
  $region5: #{tpu_custom_call.1} parent=0 // pred_fallthru
    _
  // Predicated region
  $region6: #{tpu_custom_call.1} parent=0 // pred_check
    _
  $region7: #{tpu_custom_call.1} parent=0 // pred_check_branch
    %10 = sbr.rel (0) target = $region9
  $region8: #{tpu_custom_call.1} parent=0 // pred_region
    _
  $region9: #{tpu_custom_call.1} parent=0 // pred_fallthru
    _
  %v11 = vld [vmem:[%s1] sm:$0xff]
  %v12 = vld [vmem:[%s1 + $0x8] sm:$0x1]
  %v13 = vld [vmem:[%s1 + $0x10] sm:$0xff]
  %v14 = vld [vmem:[%s1 + $0x18] sm:$0x1]
  %v15 = vld [vmem:[%s0] sm:$0x1f]
  %v16 = vld [vmem:[%s0 + $0x8] sm:$0x1f]
  %v17 = vlaneseq
  %v18 = vand.u32 %v17, 127
  %19 = vset.pattern.permute.xlu0 0
  %20 = vperm.xlu0 %19, %v15
  %v21 = vpop.permute.xlu0 %20
  %22 = vset.pattern.permute.xlu0 0
  %23 = vperm.xlu0 %22, %v16
  %v24 = vpop.permute.xlu0 %23
  %vm25 = vcmp.eq.s32.totalorder %v18, %v21
  %vm26 = vcmp.eq.s32.totalorder %v18, %v24
  %v27 = vsel %vm25, 1, 0
  %v28 = vsel %vm26, 1, 0
  %v29 = vcvt.s32.f32 %v27
  %v30 = vcvt.s32.f32 %v28
  %vm31 = vcmask 72704
  %v33 = vsel %vm31, %v29, 0
  %vm35 = vcmask 1040384
  %v37 = vsel %vm35, %v12, 0
  %39 = vmatpush.msra.mxu0 0.0
  %40 = vmatpush.msra.mxu0 0.0
  %41 = vmatpush.msra.mxu0 0.0
  %42 = vmatpush.msra.mxu0 0.0
  %43 = vmatpush.msra.mxu0 0.0
  %44 = vmatpush.msra.mxu0 0.0
  %45 = vmatpush.msra.mxu0 0.0
  %46 = vmatpush.msra.mxu0 0.0
  %47 = vmatpush.msra.mxu0 0.0
  %48 = vmatpush.msra.mxu0 0.0
  %49 = vmatpush.msra.mxu0 0.0
  %50 = vmatpush.msra.mxu0 0.0
  %51 = vmatpush.msra.mxu0 0.0
  %52 = vmatpush.msra.mxu0 0.0
  %53 = vmatpush.msra.mxu0 %v37
  %54 = vmatpush.msra.mxu0 %v11
  %55 = vmatmul.f32.gmra.mxu0 %v33
  %v56 = vpop.f32.mrf.mxu0
  %v57 = vadd.f32 0.0, %v56
  %58 = vdwg.mxu0
  %v60 = vsel %vm31, %v30, 0
  %v63 = vsel %vm35, %v14, 0
  %65 = vmatpush.msra.mxu0 0.0
  %66 = vmatpush.msra.mxu0 0.0
  %67 = vmatpush.msra.mxu0 0.0
  %68 = vmatpush.msra.mxu0 0.0
  %69 = vmatpush.msra.mxu0 0.0
  %70 = vmatpush.msra.mxu0 0.0
  %71 = vmatpush.msra.mxu0 0.0
  %72 = vmatpush.msra.mxu0 0.0
  %73 = vmatpush.msra.mxu0 0.0
  %74 = vmatpush.msra.mxu0 0.0
  %75 = vmatpush.msra.mxu0 0.0
  %76 = vmatpush.msra.mxu0 0.0
  %77 = vmatpush.msra.mxu0 0.0
  %78 = vmatpush.msra.mxu0 0.0
  %79 = vmatpush.msra.mxu0 %v63
  %80 = vmatpush.msra.mxu0 %v13
  %81 = vmatmul.f32.gmra.mxu0 %v60
  %v82 = vpop.f32.mrf.mxu0
  %v83 = vadd.f32 0.0, %v82
  %84 = vdwg.mxu0
  %vm85 = vcmask 258048
  %86 = vst.msk [vmem:[%s2] sm:$0x1f] %vm85, %v57
  %87 = vst.msk [vmem:[%s2 + $0x8] sm:$0x1f] %vm85, %v83
  // Predicated region
  $region10: #{tpu_custom_call.1} parent=0 // pred_check
    _
  $region11: #{tpu_custom_call.1} parent=0 // pred_check_branch
    %89 = sbr.rel (0) target = $region13
  $region12: #{tpu_custom_call.1} parent=0 // pred_region
    _
  $region13: #{tpu_custom_call.1} parent=0 // pred_fallthru
    _
  // Predicated region
  $region14: #{tpu_custom_call.1} parent=0 // pred_check
    _
  $region15: #{tpu_custom_call.1} parent=0 // pred_check_branch
    %91 = sbr.rel (0) target = $region17
  $region16: #{tpu_custom_call.1} parent=0 // pred_region
    _
  $region17: #{tpu_custom_call.1} parent=0 // pred_fallthru
    _

</llo_original>
